<compile_context>
chip_gen: v5e
topology: v5e:2x2
jax: 0.10.0
libtpu: 0.0.40
codegen_flags: <defaults>
</compile_context>

<pallas_src>
import jax
import jax.numpy as jnp
from jax.experimental import pallas as pl
from jax.experimental.pallas import tpu as pltpu


def fm_kernel(x_ref, rhs_ref, b_ref, o_ref):
    """FM forward for one batch tile.

    x_ref:   (TB, n)     input features (f32 or bf16)
    rhs_ref: (n, k+2)    fused resident RHS [V | w | -0.5*rowsum(V^2)]
    b_ref:   (1, 1)      bias scalar (SMEM)
    o_ref:   (TB, 1)     output tile (f32)
    """
    k = rhs_ref.shape[1] - 2
    x = x_ref[...]
    rhs = rhs_ref[...]

    # One fused MXU call: cols [0,k) = x@V, col k = x@w (col k+1 is unused here
    # but rides along for free inside the same 128-lane MXU pass).
    xv = jnp.dot(x, rhs, preferred_element_type=jnp.float32)     # (TB, k+2)
    fac = xv[:, :k]
    out_lin = xv[:, k:k + 1]                                     # (TB, 1)

    # 0.5 * sum_k (x@V)^2
    out_1 = 0.5 * jnp.sum(fac * fac, axis=1, keepdims=True)      # (TB, 1)

    # -0.5 * (x^2 @ rowsum(V^2)) -- square in f32 (v5e has no bf16 VPU).
    xf = x.astype(jnp.float32)
    nhv2s = rhs[:, k + 1:k + 2].astype(jnp.float32)              # (n, 1)
    out_2n = jnp.dot(xf * xf, nhv2s, preferred_element_type=jnp.float32)

    o_ref[...] = (out_1 + out_2n + out_lin + b_ref[0, 0]).astype(o_ref.dtype)


def _cdiv(a, b):
    return -(-a // b)


def _round_up(a, m):
    return _cdiv(a, m) * m


def _vmem_limit_bytes():
    """Generation-aware scoped-VMEM request (~3/4 of physical, <= ~100 MiB)."""
    cap = 64 * 1024 * 1024  # conservative fallback (v7x per-TC physical VMEM)
    try:
        info = pltpu.get_tpu_info()
        cap = int(getattr(info, "vmem_capacity_bytes", cap))
    except Exception:
        pass
    return int(min(cap * 3 // 4, 100 * 1024 * 1024))


def _tile_b_cap(n, x_itemsize, k, rhs_itemsize, vmem_limit):
    """Largest batch-tile (multiple of 8) whose double-buffered x tile plus the
    lane-padded resident RHS and output buffers fit the scoped-VMEM budget."""
    # Worst case: RHS double-buffered (if the single-buffer request falls back).
    rhs_resident = 2 * _round_up(n, 8) * _round_up(k + 2, 128) * max(rhs_itemsize, 4)
    avail = vmem_limit - rhs_resident - (2 << 20)       # 2 MiB compiler headroom
    per_row = 2 * n * x_itemsize + 2 * 128 * 4          # x dbl-buf + padded (TB,1) out
    cap = (max(avail, 0) // per_row) // 8 * 8
    return int(max(8, min(cap, 2048)))


def fm_forward(x, V, w, b, *, tile_b=None, compute_dtype=None):
    """x: (B, n), V: (n, k), w: (n, 1) or (1, n), b: scalar/(1,)/(1,1) -> (B, 1) f32."""
    B, n = x.shape
    k = V.shape[1]
    if compute_dtype is None:
        # Input HBM traffic follows the dtype x is already stored in; casting
        # here would add a full extra read+write pass over x in HBM.
        compute_dtype = x.dtype
    compute_dtype = jnp.dtype(compute_dtype)

    V_f32 = jnp.asarray(V, jnp.float32)
    w_col = jnp.asarray(w, jnp.float32).reshape(n, 1)
    b_sc = jnp.asarray(b, jnp.float32).reshape(1, 1)

    # Use the compute-dtype-rounded V for the x^2 term so both halves of the
    # 0.5*(sum(xV)^2 - sum(x^2 V^2)) cancellation see the same weights.
    V_q = V_f32.astype(compute_dtype).astype(jnp.float32)
    neg_half_v2s = -0.5 * jnp.sum(jnp.square(V_q), axis=1, keepdims=True)   # (n, 1)

    # Fused resident RHS [V | w | -0.5*rowsum(V^2)] -> single (n, k+2) slab.
    rhs = jnp.concatenate([V_f32, w_col, neg_half_v2s], axis=1).astype(compute_dtype)

    if x.dtype != compute_dtype:
        # Only hit when the caller explicitly requests a different traffic
        # dtype; prefer storing x in compute_dtype upstream instead.
        x = x.astype(compute_dtype)

    x_isz = compute_dtype.itemsize
    vmem_limit = _vmem_limit_bytes()

    auto_tile = tile_b is None
    if auto_tile:
        cap = _tile_b_cap(n, x_isz, k, compute_dtype.itemsize, vmem_limit)
        tile_b = B if cap >= B else cap
    assert tile_b == B or tile_b % 8 == 0, tile_b
    grid_n = _cdiv(B, tile_b)

    # Prefer an even number of grid steps so v7x's two TensorCores get equal
    # work under dimension_semantics=("parallel",).
    if auto_tile and grid_n > 1 and grid_n % 2 == 1:
        alt_tile = _round_up(_cdiv(B, grid_n + 1), 8)
        if alt_tile >= 8 and _cdiv(B, alt_tile) % 2 == 0:
            tile_b, grid_n = alt_tile, _cdiv(B, alt_tile)

    cost = pl.CostEstimate(
        flops=2 * B * n * (k + 3),
        transcendentals=0,
        bytes_accessed=B * n * x_isz + n * (k + 2) * compute_dtype.itemsize + B * 4,
    )

    def _call(single_buffer_consts):
        rhs_kwargs = {"pipeline_mode": pl.Buffered(1)} if single_buffer_consts else {}
        return pl.pallas_call(
            fm_kernel,
            out_shape=jax.ShapeDtypeStruct((B, 1), jnp.float32),
            grid_spec=pltpu.PrefetchScalarGridSpec(
                num_scalar_prefetch=0,
                grid=(grid_n,),
                in_specs=[
                    pl.BlockSpec((tile_b, n), lambda i: (i, 0)),               # x tile
                    pl.BlockSpec((n, k + 2), lambda i: (0, 0), **rhs_kwargs),  # resident RHS
                    pl.BlockSpec(memory_space=pltpu.MemorySpace.SMEM),         # bias scalar
                ],
                out_specs=pl.BlockSpec((tile_b, 1), lambda i: (i, 0)),
            ),
            compiler_params=pltpu.CompilerParams(
                dimension_semantics=("parallel",),
                vmem_limit_bytes=vmem_limit,
            ),
            cost_estimate=cost,
        )(x, rhs, b_sc)

    try:
        # Single-buffer the constant-index-map RHS slab (its block index never
        # changes across the grid), freeing VMEM for larger batch tiles.
        return _call(True)
    except Exception:
        # Fallback for Pallas versions that reject pl.Buffered(1) on a
        # pallas_call BlockSpec: default double-buffering (one extra RHS buffer).
        return _call(False)


def fm_reference(x, V, w, b):
    """Pure-JAX reference mirroring the PyTorch forward exactly."""
    x = jnp.asarray(x, jnp.float32)
    w_col = jnp.asarray(w, jnp.float32).reshape(-1, 1)
    b_sc = jnp.asarray(b, jnp.float32).reshape(1, 1)
    out_1 = jnp.sum(jnp.square(x @ V), axis=1, keepdims=True)
    out_2 = jnp.sum(jnp.square(x) @ jnp.square(V), axis=1, keepdims=True)
    return 0.5 * (out_1 - out_2) + x @ w_col + b_sc


if __name__ == "__main__":
    # Shapes implied by the module: x (B, n), V (n, k), Linear(n, 1).
    B, n, k = 16, 32, 8

    key = jax.random.PRNGKey(0)
    kx, kv, kw, kb = jax.random.split(key, 4)

    x = jax.random.normal(kx, (B, n), dtype=jnp.float32)
    # V = (rand(n, k) * 2 - 1) / k  (torch.rand is uniform[0,1))
    V = (jax.random.uniform(kv, (n, k), dtype=jnp.float32) * 2.0 - 1.0) / k
    # nn.Linear(n, 1) default init: uniform(-1/sqrt(n), 1/sqrt(n))
    bound = 1.0 / float(n) ** 0.5
    w = jax.random.uniform(kw, (n, 1), minval=-bound, maxval=bound, dtype=jnp.float32)
    b = jax.random.uniform(kb, (1, 1), minval=-bound, maxval=bound, dtype=jnp.float32)

    ref = fm_reference(x, V, w, b)

    # 1) f32 path, auto tiling (single full-batch block here).
    out = jax.block_until_ready(fm_forward(x, V, w, b))
    assert out.shape == (B, 1), out.shape
    assert jnp.allclose(out, ref, atol=1e-5, rtol=1e-5), (out, ref)

    # 2) Non-divisible batch with a multi-step grid (exercises cdiv grid and
    #    the padded/masked edge block).
    B2 = 20
    x2 = jax.random.normal(jax.random.PRNGKey(1), (B2, n), dtype=jnp.float32)
    ref2 = fm_reference(x2, V, w, b)
    out2 = jax.block_until_ready(fm_forward(x2, V, w, b, tile_b=8))
    assert out2.shape == (B2, 1), out2.shape
    assert jnp.allclose(out2, ref2, atol=1e-5, rtol=1e-5), (out2, ref2)

    # 3) bf16 input-traffic path: x already stored bf16 upstream, so the
    #    wrapper performs no extra cast; f32 accumulation in the kernel.
    x_bf16 = x.astype(jnp.bfloat16)
    out_bf16 = jax.block_until_ready(fm_forward(x_bf16, V, w, b))
    assert out_bf16.shape == (B, 1), out_bf16.shape
    assert jnp.allclose(out_bf16, ref, atol=1e-1, rtol=5e-2), (out_bf16, ref)

    print("KERNEL_OK")
</pallas_src>

<mosaic_0001>
module attributes {stable_mosaic.version = 11 : i64} {
  func.func @fm_kernel(%arg0: i32, %arg1: memref<16x32xf32, #tpu.memory_space<vmem>>, %arg2: memref<32x10xf32, #tpu.memory_space<vmem>>, %arg3: memref<1x1xf32, #tpu.memory_space<smem>>, %arg4: memref<16x1xf32, #tpu.memory_space<vmem>>) attributes {dimension_semantics = [#tpu.dimension_semantics<parallel>], iteration_bounds = array<i64: 1>, scalar_prefetch = 0 : i64, scratch_operands = 0 : i64, tpu.core_type = #tpu.core_type<tc>, window_params = [{transform_indices = @transform_0, window_bounds = array<i64: 16, 32>}, {pipeline_mode = #tpu.pipeline_mode<synchronous>, transform_indices = @transform_1, window_bounds = array<i64: 32, 10>}, {transform_indices = @transform_2, window_bounds = array<i64: 1, 1>}, {transform_indices = @transform_3, window_bounds = array<i64: 16, 1>}]} {
    %c0 = arith.constant 0 : index
    %c0_0 = arith.constant 0 : index
    %0 = vector.load %arg1[%c0, %c0_0] : memref<16x32xf32, #tpu.memory_space<vmem>>, vector<16x32xf32>
    %c0_1 = arith.constant 0 : index
    %c0_2 = arith.constant 0 : index
    %1 = vector.load %arg2[%c0_1, %c0_2] : memref<32x10xf32, #tpu.memory_space<vmem>>, vector<32x10xf32>
    %cst = arith.constant dense<0.000000e+00> : vector<16x10xf32>
    %2 = tpu.matmul %0, %1, %cst {dimension_numbers = #tpu.dot_dimension_numbers<[1], [0], [0], [1], [0, 0, 1, 1], [], []>} : vector<16x32xf32>, vector<32x10xf32>, vector<16x10xf32> -> vector<16x10xf32>
    %3 = vector.extract_strided_slice %2 {offsets = [0, 0], sizes = [16, 8], strides = [1, 1]} : vector<16x10xf32> to vector<16x8xf32>
    %4 = vector.extract_strided_slice %2 {offsets = [0, 8], sizes = [16, 1], strides = [1, 1]} : vector<16x10xf32> to vector<16x1xf32>
    %5 = arith.mulf %3, %3 : vector<16x8xf32>
    %cst_3 = arith.constant dense<0.000000e+00> : vector<16xf32>
    %6 = vector.multi_reduction <add>, %5, %cst_3 [1] : vector<16x8xf32> to vector<16xf32>
    %7 = vector.shape_cast %6 : vector<16xf32> to vector<16x1xf32>
    %cst_4 = arith.constant 5.000000e-01 : f32
    %8 = vector.broadcast %cst_4 : f32 to vector<16x1xf32>
    %9 = arith.mulf %8, %7 : vector<16x1xf32>
    %10 = vector.extract_strided_slice %1 {offsets = [0, 9], sizes = [32, 1], strides = [1, 1]} : vector<32x10xf32> to vector<32x1xf32>
    %11 = arith.mulf %0, %0 : vector<16x32xf32>
    %cst_5 = arith.constant dense<0.000000e+00> : vector<16x1xf32>
    %12 = tpu.matmul %11, %10, %cst_5 {dimension_numbers = #tpu.dot_dimension_numbers<[1], [0], [0], [1], [0, 0, 1, 1], [], []>} : vector<16x32xf32>, vector<32x1xf32>, vector<16x1xf32> -> vector<16x1xf32>
    %13 = arith.addf %9, %12 : vector<16x1xf32>
    %14 = arith.addf %13, %4 : vector<16x1xf32>
    %c0_6 = arith.constant 0 : index
    %c0_7 = arith.constant 0 : index
    %15 = memref.load %arg3[%c0_6, %c0_7] : memref<1x1xf32, #tpu.memory_space<smem>>
    %16 = vector.broadcast %15 : f32 to vector<16x1xf32>
    %17 = arith.addf %14, %16 : vector<16x1xf32>
    %c0_8 = arith.constant 0 : index
    %c0_9 = arith.constant 0 : index
    %18 = vector.load %arg4[%c0_8, %c0_9] : memref<16x1xf32, #tpu.memory_space<vmem>>, vector<16x1xf32>
    tpu.vector_store %arg4[%c0_8, %c0_9], %17 {strides = array<i32>} : memref<16x1xf32, #tpu.memory_space<vmem>>, vector<16x1xf32>,
    return
  }
  func.func @transform_0(%arg0: i32) -> (i32, i32) {
    %c0_i32 = arith.constant 0 : i32
    %c0_i32_0 = arith.constant 0 : i32
    return %arg0, %c0_i32 : i32, i32
  }
  func.func @transform_1(%arg0: i32) -> (i32, i32) {
    %c0_i32 = arith.constant 0 : i32
    %c0_i32_0 = arith.constant 0 : i32
    %c0_i32_1 = arith.constant 0 : i32
    return %c0_i32, %c0_i32_0 : i32, i32
  }
  func.func @transform_2(%arg0: i32) -> (i32, i32) {
    %c0_i32 = arith.constant 0 : i32
    %c0_i32_0 = arith.constant 0 : i32
    %c0_i32_1 = arith.constant 0 : i32
    return %c0_i32, %c0_i32_0 : i32, i32
  }
  func.func @transform_3(%arg0: i32) -> (i32, i32) {
    %c0_i32 = arith.constant 0 : i32
    %c0_i32_0 = arith.constant 0 : i32
    return %arg0, %c0_i32 : i32, i32
  }
}

module attributes {stable_mosaic.version = 11 : i64} {
  func.func @fm_kernel(%arg0: i32, %arg1: memref<16x32xf32, #tpu.memory_space<vmem>>, %arg2: memref<32x10xf32, #tpu.memory_space<vmem>>, %arg3: memref<1x1xf32, #tpu.memory_space<smem>>, %arg4: memref<16x1xf32, #tpu.memory_space<vmem>>) attributes {dimension_semantics = [#tpu.dimension_semantics<parallel>], iteration_bounds = array<i64: 1>, scalar_prefetch = 0 : i64, scratch_operands = 0 : i64, tpu.core_type = #tpu.core_type<tc>, window_params = [{transform_indices = @transform_0, window_bounds = array<i64: 16, 32>}, {pipeline_mode = #tpu.pipeline_mode<synchronous>, transform_indices = @transform_1, window_bounds = array<i64: 32, 10>}, {transform_indices = @transform_2, window_bounds = array<i64: 1, 1>}, {transform_indices = @transform_3, window_bounds = array<i64: 16, 1>}]} {
    %c0 = arith.constant 0 : index
    %c0_0 = arith.constant 0 : index
    %0 = vector.load %arg1[%c0, %c0_0] : memref<16x32xf32, #tpu.memory_space<vmem>>, vector<16x32xf32>
    %c0_1 = arith.constant 0 : index
    %c0_2 = arith.constant 0 : index
    %1 = vector.load %arg2[%c0_1, %c0_2] : memref<32x10xf32, #tpu.memory_space<vmem>>, vector<32x10xf32>
    %cst = arith.constant dense<0.000000e+00> : vector<16x10xf32>
    %2 = tpu.matmul %0, %1, %cst {dimension_numbers = #tpu.dot_dimension_numbers<[1], [0], [0], [1], [0, 0, 1, 1], [], []>} : vector<16x32xf32>, vector<32x10xf32>, vector<16x10xf32> -> vector<16x10xf32>
    %3 = vector.extract_strided_slice %2 {offsets = [0, 0], sizes = [16, 8], strides = [1, 1]} : vector<16x10xf32> to vector<16x8xf32>
    %4 = vector.extract_strided_slice %2 {offsets = [0, 8], sizes = [16, 1], strides = [1, 1]} : vector<16x10xf32> to vector<16x1xf32>
    %5 = arith.mulf %3, %3 : vector<16x8xf32>
    %cst_3 = arith.constant dense<0.000000e+00> : vector<16xf32>
    %6 = vector.multi_reduction <add>, %5, %cst_3 [1] : vector<16x8xf32> to vector<16xf32>
    %7 = vector.shape_cast %6 : vector<16xf32> to vector<16x1xf32>
    %cst_4 = arith.constant 5.000000e-01 : f32
    %8 = vector.broadcast %cst_4 : f32 to vector<16x1xf32>
    %9 = arith.mulf %8, %7 : vector<16x1xf32>
    %10 = vector.extract_strided_slice %1 {offsets = [0, 9], sizes = [32, 1], strides = [1, 1]} : vector<32x10xf32> to vector<32x1xf32>
    %11 = arith.mulf %0, %0 : vector<16x32xf32>
    %cst_5 = arith.constant dense<0.000000e+00> : vector<16x1xf32>
    %12 = tpu.matmul %11, %10, %cst_5 {dimension_numbers = #tpu.dot_dimension_numbers<[1], [0], [0], [1], [0, 0, 1, 1], [], []>} : vector<16x32xf32>, vector<32x1xf32>, vector<16x1xf32> -> vector<16x1xf32>
    %13 = arith.addf %9, %12 : vector<16x1xf32>
    %14 = arith.addf %13, %4 : vector<16x1xf32>
    %c0_6 = arith.constant 0 : index
    %c0_7 = arith.constant 0 : index
    %15 = memref.load %arg3[%c0_6, %c0_7] : memref<1x1xf32, #tpu.memory_space<smem>>
    %16 = vector.broadcast %15 : f32 to vector<16x1xf32>
    %17 = arith.addf %14, %16 : vector<16x1xf32>
    %c0_8 = arith.constant 0 : index
    %c0_9 = arith.constant 0 : index
    %18 = vector.load %arg4[%c0_8, %c0_9] : memref<16x1xf32, #tpu.memory_space<vmem>>, vector<16x1xf32>
    tpu.vector_store %arg4[%c0_8, %c0_9], %17 {strides = array<i32>} : memref<16x1xf32, #tpu.memory_space<vmem>>, vector<16x1xf32>,
    return
  }
  func.func @transform_0(%arg0: i32) -> (i32, i32) {
    %c0_i32 = arith.constant 0 : i32
    %c0_i32_0 = arith.constant 0 : i32
    return %arg0, %c0_i32 : i32, i32
  }
  func.func @transform_1(%arg0: i32) -> (i32, i32) {
    %c0_i32 = arith.constant 0 : i32
    %c0_i32_0 = arith.constant 0 : i32
    %c0_i32_1 = arith.constant 0 : i32
    return %c0_i32, %c0_i32_0 : i32, i32
  }
  func.func @transform_2(%arg0: i32) -> (i32, i32) {
    %c0_i32 = arith.constant 0 : i32
    %c0_i32_0 = arith.constant 0 : i32
    %c0_i32_1 = arith.constant 0 : i32
    return %c0_i32, %c0_i32_0 : i32, i32
  }
  func.func @transform_3(%arg0: i32) -> (i32, i32) {
    %c0_i32 = arith.constant 0 : i32
    %c0_i32_0 = arith.constant 0 : i32
    return %arg0, %c0_i32 : i32, i32
  }
}

</mosaic_0001>

<llo_original>
// kernel: tpu_custom_call.1
$region0: #{tpu_custom_call.1}
  #allocation0 [shape = 'u32[]', space=smem, size = 0x4, offset = 0x4, fixed_abs, tag = 'smem constant byte address 0x4 - core index']
  #allocation1 [shape = 'u32[72,128]{1,0:T(1,128)}', space=vmem, size = 0x9000, scoped, tag = 'internal scratch']
  #allocation2 [shape = 'f32[1,1]{1,0:T(1,128)S(6)}', space=smem, size = 0x200, scoped, tag = 'scoped memory for tpu_custom_call.1']
  %s0 = inlined_call_operand.vmem [shape: f32[16,32], index: 0, kind: input, shape index: {}]
  %s1 = inlined_call_operand.vmem [shape: f32[32,10], index: 1, kind: input, shape index: {}]
  %s2 = inlined_call_operand.<no memory space> [shape: f32[1,1], index: 2, kind: input, shape index: {}]
  %s3 = inlined_call_operand.vmem [shape: f32[16,1], index: 3, kind: output, shape index: {}]
  %s4 = sld [smem:[#allocation0]]
  $region22: #{tpu_custom_call.1} parent=0
    _
  %s6 = ssub.s32 1, %s4
  %s7 = scalar_select 0, %s6, %s4
  %8 = sst [smem:[#allocation2]] %s2
  // Predicated region
  $region2: #{tpu_custom_call.1} parent=0 // pred_check
    _
  $region3: #{tpu_custom_call.1} parent=0 // pred_check_branch
    %10 = sbr.rel (0) target = $region5
  $region4: #{tpu_custom_call.1} parent=0 // pred_region
    _
  $region5: #{tpu_custom_call.1} parent=0 // pred_fallthru
    _
  // Predicated region
  $region6: #{tpu_custom_call.1} parent=0 // pred_check
    _
  $region7: #{tpu_custom_call.1} parent=0 // pred_check_branch
    %12 = sbr.rel (0) target = $region9
  $region8: #{tpu_custom_call.1} parent=0 // pred_region
    _
  $region9: #{tpu_custom_call.1} parent=0 // pred_fallthru
    _
  // Predicated region
  $region10: #{tpu_custom_call.1} parent=0 // pred_check
    _
  $region11: #{tpu_custom_call.1} parent=0 // pred_check_branch
    %14 = sbr.rel (0) target = $region13
  $region12: #{tpu_custom_call.1} parent=0 // pred_region
    _
  $region13: #{tpu_custom_call.1} parent=0 // pred_fallthru
    _
  %v15 = vld [vmem:[%s0] sm:$0xff]
  %v16 = vld [vmem:[%s0 + $0x8] sm:$0xff]
  %v17 = vld [vmem:[%s1] sm:$0xff]
  %v18 = vld [vmem:[%s1 + $0x8] sm:$0xff]
  %v19 = vld [vmem:[%s1 + $0x10] sm:$0xff]
  %v20 = vld [vmem:[%s1 + $0x18] sm:$0xff]
  %vm21 = vcmask 261120
  %v23 = vsel %vm21, %v15, 0
  %v26 = vsel %vm21, %v16, 0
  %28 = vmatpush.msra.mxu0 0.0
  %29 = vmatpush.msra.mxu0 0.0
  %30 = vmatpush.msra.mxu0 0.0
  %31 = vmatpush.msra.mxu0 0.0
  %32 = vmatpush.msra.mxu0 0.0
  %33 = vmatpush.msra.mxu0 0.0
  %34 = vmatpush.msra.mxu0 0.0
  %35 = vmatpush.msra.mxu0 0.0
  %36 = vmatpush.msra.mxu0 0.0
  %37 = vmatpush.msra.mxu0 0.0
  %38 = vmatpush.msra.mxu0 0.0
  %39 = vmatpush.msra.mxu0 0.0
  %40 = vmatpush.msra.mxu0 %v20
  %41 = vmatpush.msra.mxu0 %v19
  %42 = vmatpush.msra.mxu0 %v18
  %43 = vmatpush.msra.mxu0 %v17
  %44 = vmatmul.f32.gmra.mxu0 %v23
  %v45 = vpop.f32.mrf.mxu0
  %v46 = vadd.f32 0.0, %v45
  %47 = vmatmul.f32.gmra.mxu0 %v26
  %v48 = vpop.f32.mrf.mxu0
  %v49 = vadd.f32 0.0, %v48
  %50 = vdwg.mxu0
  %v51 = vmul.f32 %v46, %v46
  %v52 = vmul.f32 %v49, %v49
  %vm53 = vcmask 64512
  %v54 = vsel %vm53, %v51, 0.0
  %55 = vadd.xlane.f32.xlu0 %v54
  %v56 = vpop.xlane.xlu0 %55
  %v57 = vsel %vm53, %v52, 0.0
  %58 = vadd.xlane.f32.xlu0 %v57
  %v59 = vpop.xlane.xlu0 %58
  %v60 = vmul.f32 %v56, 0.5
  %v61 = vmul.f32 %v59, 0.5
  %v62 = vmul.f32 %v15, %v15
  %v63 = vmul.f32 %v16, %v16
  %68 = vrot.lane.b32.xlu0 %v17, 119
  %v69 = vpop.permute.xlu0 %68
  %70 = vrot.lane.b32.xlu0 %v18, 119
  %v71 = vpop.permute.xlu0 %70
  %72 = vrot.lane.b32.xlu0 %v19, 119
  %v73 = vpop.permute.xlu0 %72
  %74 = vrot.lane.b32.xlu0 %v20, 119
  %v75 = vpop.permute.xlu0 %74
  %v81 = vsel %vm21, %v62, 0
  %v84 = vsel %vm21, %v63, 0
  %86 = vmatpush.msra.mxu0 0.0
  %87 = vmatpush.msra.mxu0 0.0
  %88 = vmatpush.msra.mxu0 0.0
  %89 = vmatpush.msra.mxu0 0.0
  %90 = vmatpush.msra.mxu0 0.0
  %91 = vmatpush.msra.mxu0 0.0
  %92 = vmatpush.msra.mxu0 0.0
  %93 = vmatpush.msra.mxu0 0.0
  %94 = vmatpush.msra.mxu0 0.0
  %95 = vmatpush.msra.mxu0 0.0
  %96 = vmatpush.msra.mxu0 0.0
  %97 = vmatpush.msra.mxu0 0.0
  %98 = vmatpush.msra.mxu0 %v75
  %99 = vmatpush.msra.mxu0 %v73
  %100 = vmatpush.msra.mxu0 %v71
  %101 = vmatpush.msra.mxu0 %v69
  %102 = vmatmul.f32.gmra.mxu0 %v81
  %v103 = vpop.f32.mrf.mxu0
  %v104 = vadd.f32 0.0, %v103
  %105 = vmatmul.f32.gmra.mxu0 %v84
  %v106 = vpop.f32.mrf.mxu0
  %v107 = vadd.f32 0.0, %v106
  %108 = vdwg.mxu0
  %v109 = vadd.f32 %v60, %v104
  %v110 = vadd.f32 %v61, %v107
  %113 = vrot.lane.b32.xlu0 %v46, 120
  %v114 = vpop.permute.xlu0 %113
  %115 = vrot.lane.b32.xlu0 %v49, 120
  %v116 = vpop.permute.xlu0 %115
  %v119 = vadd.f32 %v109, %v114
  %v120 = vadd.f32 %v110, %v116
  %s121 = sld [smem:[#allocation2]]
  %v122 = vstv %s121
  %v123 = vadd.f32 %v119, %v122
  %v124 = vadd.f32 %v120, %v122
  %vm125 = vcmask 7168
  %126 = vst.msk [vmem:[%s3] sm:$0xff] %vm125, %v123
  %127 = vst.msk [vmem:[%s3 + $0x8] sm:$0xff] %vm125, %v124
  // Predicated region
  $region14: #{tpu_custom_call.1} parent=0 // pred_check
    _
  $region15: #{tpu_custom_call.1} parent=0 // pred_check_branch
    %129 = sbr.rel (0) target = $region17
  $region16: #{tpu_custom_call.1} parent=0 // pred_region
    _
  $region17: #{tpu_custom_call.1} parent=0 // pred_fallthru
    _
  // Predicated region
  $region18: #{tpu_custom_call.1} parent=0 // pred_check
    _
  $region19: #{tpu_custom_call.1} parent=0 // pred_check_branch
    %131 = sbr.rel (0) target = $region21
  $region20: #{tpu_custom_call.1} parent=0 // pred_region
    _
  $region21: #{tpu_custom_call.1} parent=0 // pred_fallthru
    _

// kernel: tpu_custom_call.1
$region0: #{tpu_custom_call.1}
  #allocation0 [shape = 'u32[]', space=smem, size = 0x4, offset = 0x4, fixed_abs, tag = 'smem constant byte address 0x4 - core index']
  #allocation1 [shape = 'u32[72,128]{1,0:T(1,128)}', space=vmem, size = 0x9000, scoped, tag = 'internal scratch']
  #allocation2 [shape = 'f32[1,1]{1,0:T(1,128)S(6)}', space=smem, size = 0x200, scoped, tag = 'scoped memory for tpu_custom_call.1']
  %s0 = inlined_call_operand.vmem [shape: f32[16,32], index: 0, kind: input, shape index: {}]
  %s1 = inlined_call_operand.vmem [shape: f32[32,10], index: 1, kind: input, shape index: {}]
  %s2 = inlined_call_operand.<no memory space> [shape: f32[1,1], index: 2, kind: input, shape index: {}]
  %s3 = inlined_call_operand.vmem [shape: f32[16,1], index: 3, kind: output, shape index: {}]
  %s4 = sld [smem:[#allocation0]]
  $region22: #{tpu_custom_call.1} parent=0
    _
  %s6 = ssub.s32 1, %s4
  %s7 = scalar_select 0, %s6, %s4
  %8 = sst [smem:[#allocation2]] %s2
  // Predicated region
  $region2: #{tpu_custom_call.1} parent=0 // pred_check
    _
  $region3: #{tpu_custom_call.1} parent=0 // pred_check_branch
    %10 = sbr.rel (0) target = $region5
  $region4: #{tpu_custom_call.1} parent=0 // pred_region
    _
  $region5: #{tpu_custom_call.1} parent=0 // pred_fallthru
    _
  // Predicated region
  $region6: #{tpu_custom_call.1} parent=0 // pred_check
    _
  $region7: #{tpu_custom_call.1} parent=0 // pred_check_branch
    %12 = sbr.rel (0) target = $region9
  $region8: #{tpu_custom_call.1} parent=0 // pred_region
    _
  $region9: #{tpu_custom_call.1} parent=0 // pred_fallthru
    _
  // Predicated region
  $region10: #{tpu_custom_call.1} parent=0 // pred_check
    _
  $region11: #{tpu_custom_call.1} parent=0 // pred_check_branch
    %14 = sbr.rel (0) target = $region13
  $region12: #{tpu_custom_call.1} parent=0 // pred_region
    _
  $region13: #{tpu_custom_call.1} parent=0 // pred_fallthru
    _
  %v15 = vld [vmem:[%s0] sm:$0xff]
  %v16 = vld [vmem:[%s0 + $0x8] sm:$0xff]
  %v17 = vld [vmem:[%s1] sm:$0xff]
  %v18 = vld [vmem:[%s1 + $0x8] sm:$0xff]
  %v19 = vld [vmem:[%s1 + $0x10] sm:$0xff]
  %v20 = vld [vmem:[%s1 + $0x18] sm:$0xff]
  %vm21 = vcmask 261120
  %v23 = vsel %vm21, %v15, 0
  %v26 = vsel %vm21, %v16, 0
  %28 = vmatpush.msra.mxu0 0.0
  %29 = vmatpush.msra.mxu0 0.0
  %30 = vmatpush.msra.mxu0 0.0
  %31 = vmatpush.msra.mxu0 0.0
  %32 = vmatpush.msra.mxu0 0.0
  %33 = vmatpush.msra.mxu0 0.0
  %34 = vmatpush.msra.mxu0 0.0
  %35 = vmatpush.msra.mxu0 0.0
  %36 = vmatpush.msra.mxu0 0.0
  %37 = vmatpush.msra.mxu0 0.0
  %38 = vmatpush.msra.mxu0 0.0
  %39 = vmatpush.msra.mxu0 0.0
  %40 = vmatpush.msra.mxu0 %v20
  %41 = vmatpush.msra.mxu0 %v19
  %42 = vmatpush.msra.mxu0 %v18
  %43 = vmatpush.msra.mxu0 %v17
  %44 = vmatmul.f32.gmra.mxu0 %v23
  %v45 = vpop.f32.mrf.mxu0
  %v46 = vadd.f32 0.0, %v45
  %47 = vmatmul.f32.gmra.mxu0 %v26
  %v48 = vpop.f32.mrf.mxu0
  %v49 = vadd.f32 0.0, %v48
  %50 = vdwg.mxu0
  %v51 = vmul.f32 %v46, %v46
  %v52 = vmul.f32 %v49, %v49
  %vm53 = vcmask 64512
  %v54 = vsel %vm53, %v51, 0.0
  %55 = vadd.xlane.f32.xlu0 %v54
  %v56 = vpop.xlane.xlu0 %55
  %v57 = vsel %vm53, %v52, 0.0
  %58 = vadd.xlane.f32.xlu0 %v57
  %v59 = vpop.xlane.xlu0 %58
  %v60 = vmul.f32 %v56, 0.5
  %v61 = vmul.f32 %v59, 0.5
  %v62 = vmul.f32 %v15, %v15
  %v63 = vmul.f32 %v16, %v16
  %68 = vrot.lane.b32.xlu0 %v17, 119
  %v69 = vpop.permute.xlu0 %68
  %70 = vrot.lane.b32.xlu0 %v18, 119
  %v71 = vpop.permute.xlu0 %70
  %72 = vrot.lane.b32.xlu0 %v19, 119
  %v73 = vpop.permute.xlu0 %72
  %74 = vrot.lane.b32.xlu0 %v20, 119
  %v75 = vpop.permute.xlu0 %74
  %v81 = vsel %vm21, %v62, 0
  %v84 = vsel %vm21, %v63, 0
  %86 = vmatpush.msra.mxu0 0.0
  %87 = vmatpush.msra.mxu0 0.0
  %88 = vmatpush.msra.mxu0 0.0
  %89 = vmatpush.msra.mxu0 0.0
  %90 = vmatpush.msra.mxu0 0.0
  %91 = vmatpush.msra.mxu0 0.0
  %92 = vmatpush.msra.mxu0 0.0
  %93 = vmatpush.msra.mxu0 0.0
  %94 = vmatpush.msra.mxu0 0.0
  %95 = vmatpush.msra.mxu0 0.0
  %96 = vmatpush.msra.mxu0 0.0
  %97 = vmatpush.msra.mxu0 0.0
  %98 = vmatpush.msra.mxu0 %v75
  %99 = vmatpush.msra.mxu0 %v73
  %100 = vmatpush.msra.mxu0 %v71
  %101 = vmatpush.msra.mxu0 %v69
  %102 = vmatmul.f32.gmra.mxu0 %v81
  %v103 = vpop.f32.mrf.mxu0
  %v104 = vadd.f32 0.0, %v103
  %105 = vmatmul.f32.gmra.mxu0 %v84
  %v106 = vpop.f32.mrf.mxu0
  %v107 = vadd.f32 0.0, %v106
  %108 = vdwg.mxu0
  %v109 = vadd.f32 %v60, %v104
  %v110 = vadd.f32 %v61, %v107
  %113 = vrot.lane.b32.xlu0 %v46, 120
  %v114 = vpop.permute.xlu0 %113
  %115 = vrot.lane.b32.xlu0 %v49, 120
  %v116 = vpop.permute.xlu0 %115
  %v119 = vadd.f32 %v109, %v114
  %v120 = vadd.f32 %v110, %v116
  %s121 = sld [smem:[#allocation2]]
  %v122 = vstv %s121
  %v123 = vadd.f32 %v119, %v122
  %v124 = vadd.f32 %v120, %v122
  %vm125 = vcmask 7168
  %126 = vst.msk [vmem:[%s3] sm:$0xff] %vm125, %v123
  %127 = vst.msk [vmem:[%s3 + $0x8] sm:$0xff] %vm125, %v124
  // Predicated region
  $region14: #{tpu_custom_call.1} parent=0 // pred_check
    _
  $region15: #{tpu_custom_call.1} parent=0 // pred_check_branch
    %129 = sbr.rel (0) target = $region17
  $region16: #{tpu_custom_call.1} parent=0 // pred_region
    _
  $region17: #{tpu_custom_call.1} parent=0 // pred_fallthru
    _
  // Predicated region
  $region18: #{tpu_custom_call.1} parent=0 // pred_check
    _
  $region19: #{tpu_custom_call.1} parent=0 // pred_check_branch
    %131 = sbr.rel (0) target = $region21
  $region20: #{tpu_custom_call.1} parent=0 // pred_region
    _
  $region21: #{tpu_custom_call.1} parent=0 // pred_fallthru
    _

</llo_original>
